<compile_context>
chip_gen: v6e
topology: v6e:2x2x1
jax: 0.10.0
libtpu: 0.0.40
codegen_flags: <defaults>
</compile_context>

<pallas_src>
import jax
import jax.numpy as jnp
from jax.experimental import pallas as pl
from jax.experimental.pallas import tpu as pltpu

# Model dims (from the PyTorch module)
INPUT_SIZE = 7
IN_PAD = 8               # sublane-aligned K for layer 1 (zero-padded column)
LAYER1 = 128
LAYER2 = 256
LAYER3 = 64
OUTPUT_SIZE = 4

LEAKY_SLOPE = 0.01       # F.leaky_relu default negative_slope
SUBLANE = 8
MAX_TB = 512             # max batch tile (multiple of 256 for v6e/v7x MXU rows)


def _leaky_relu(x):
    return jnp.where(x > 0, x, LEAKY_SLOPE * x)


def dqn_kernel(x_ref,
               w1_ref, b1_ref,
               w2_ref, b2_ref,
               w3_ref, b3_ref,
               w4_ref, b4_ref,
               o_ref):
    # x is already bf16 (cast + padded in the wrapper). Weights are bf16;
    # accumulate in f32 on the MXU, keep bias add / leaky_relu in f32
    # (v5e VPU has no bf16), downcast to bf16 only as the next dot operand.
    x = x_ref[...]

    h1 = _leaky_relu(
        jnp.dot(x, w1_ref[...], preferred_element_type=jnp.float32) + b1_ref[...]
    ).astype(jnp.bfloat16)

    h2 = _leaky_relu(
        jnp.dot(h1, w2_ref[...], preferred_element_type=jnp.float32) + b2_ref[...]
    ).astype(jnp.bfloat16)

    h3 = _leaky_relu(
        jnp.dot(h2, w3_ref[...], preferred_element_type=jnp.float32) + b3_ref[...]
    ).astype(jnp.bfloat16)

    # Final layer: narrow (TB, 4) output written directly (masked vst is
    # cheap; saves the big f32 HBM writeback of a 128-lane padded slab).
    out = jnp.dot(h3, w4_ref[...], preferred_element_type=jnp.float32) + b4_ref[...]
    o_ref[...] = out.astype(o_ref.dtype)


def _round_up(n, m):
    return pl.cdiv(n, m) * m


def _tiling_for_batch(B):
    """Pick (B_pad, TB): pad batch only to a sublane multiple, aim for >=2
    grid steps (v7x megacore) when possible, cap the tile at MAX_TB."""
    B8 = _round_up(B, SUBLANE)
    if B8 >= 2 * MAX_TB:
        TB = MAX_TB
    else:
        TB = max(SUBLANE, _round_up(pl.cdiv(B8, 2), SUBLANE))
    B_pad = _round_up(B8, TB)
    return B_pad, TB


@jax.jit
def dqn_forward(x, params):
    """x: [B, INPUT_SIZE] float32. params: dict of bf16 weights / f32 biases.
       Returns [B, OUTPUT_SIZE] float32."""
    B = x.shape[0]
    B_pad, TB = _tiling_for_batch(B)

    # bf16 input stream, zero-padded to (B_pad, IN_PAD).
    x = jnp.pad(x.astype(jnp.bfloat16),
                ((0, B_pad - B), (0, IN_PAD - INPUT_SIZE)))

    w1, b1 = params["w1"], params["b1"]
    w2, b2 = params["w2"], params["b2"]
    w3, b3 = params["w3"], params["b3"]
    w4, b4 = params["w4"], params["b4"]

    def const_spec(a):
        # full-array block, resident in VMEM across the batch grid
        return pl.BlockSpec(a.shape, lambda i: (0, 0))

    out = pl.pallas_call(
        dqn_kernel,
        out_shape=jax.ShapeDtypeStruct((B_pad, OUTPUT_SIZE), jnp.float32),
        grid_spec=pl.GridSpec(
            grid=(B_pad // TB,),
            in_specs=[
                pl.BlockSpec((TB, IN_PAD), lambda i: (i, 0)),
                const_spec(w1), const_spec(b1),
                const_spec(w2), const_spec(b2),
                const_spec(w3), const_spec(b3),
                const_spec(w4), const_spec(b4),
            ],
            out_specs=pl.BlockSpec((TB, OUTPUT_SIZE), lambda i: (i, 0)),
        ),
        compiler_params=pltpu.CompilerParams(
            dimension_semantics=("parallel",),
            vmem_limit_bytes=32 * 1024 * 1024,
        ),
    )(x, w1, b1, w2, b2, w3, b3, w4, b4)

    return out[:B, :]


def init_params(key):
    """PyTorch nn.Linear default init: U(-1/sqrt(fan_in), 1/sqrt(fan_in)).
       Weights stored pre-transposed as [in_features, out_features] in bf16;
       biases kept f32 as [1, out_features]. w1 is zero-padded 7 -> 8 input
       rows to match the padded input column (exact zeros, no numeric change)."""
    dims = [(INPUT_SIZE, LAYER1), (LAYER1, LAYER2),
            (LAYER2, LAYER3), (LAYER3, OUTPUT_SIZE)]
    params = {}
    for i, (fin, fout) in enumerate(dims, start=1):
        key, kw, kb = jax.random.split(key, 3)
        bound = 1.0 / (fin ** 0.5)
        w = jax.random.uniform(kw, (fin, fout), jnp.float32, -bound, bound)
        b = jax.random.uniform(kb, (1, fout), jnp.float32, -bound, bound)
        if i == 1:
            w = jnp.pad(w, ((0, IN_PAD - INPUT_SIZE), (0, 0)))
        params[f"w{i}"] = w.astype(jnp.bfloat16)
        params[f"b{i}"] = b  # f32
    return params


def reference_forward(x, params):
    """Pure-JAX reference using the same bf16 weights / f32 accumulation."""
    h = jnp.pad(x.astype(jnp.bfloat16), ((0, 0), (0, IN_PAD - INPUT_SIZE)))
    for i in (1, 2, 3):
        h = jnp.dot(h, params[f"w{i}"],
                    preferred_element_type=jnp.float32) + params[f"b{i}"]
        h = jnp.where(h > 0, h, LEAKY_SLOPE * h).astype(jnp.bfloat16)
    out = jnp.dot(h, params["w4"],
                  preferred_element_type=jnp.float32) + params["b4"]
    return out


if __name__ == "__main__":
    key = jax.random.PRNGKey(0)
    kp, kx = jax.random.split(key)
    params = init_params(kp)

    # Small batch (grid = 1 step) and a slightly larger one (grid = 2 steps,
    # exercises batch padding + megacore-parallel axis).
    for B in (8, 24):
        key, kx = jax.random.split(key)
        x = jax.random.normal(kx, (B, INPUT_SIZE), jnp.float32)

        out = jax.block_until_ready(dqn_forward(x, params))
        ref = reference_forward(x, params)

        assert out.shape == (B, OUTPUT_SIZE)
        # bf16-weight path: kernel (MXU) vs XLA reference may differ by rounding
        assert jnp.allclose(out, ref, atol=1e-2, rtol=1e-2), \
            f"mismatch vs JAX reference at B={B}"

    print("KERNEL_OK")
</pallas_src>

<mosaic_0001>
module attributes {stable_mosaic.version = 11 : i64} {
  func.func @dqn_kernel(%arg0: i32, %arg1: memref<8x8xbf16, #tpu.memory_space<vmem>>, %arg2: memref<8x128xbf16, #tpu.memory_space<vmem>>, %arg3: memref<1x128xf32, #tpu.memory_space<vmem>>, %arg4: memref<128x256xbf16, #tpu.memory_space<vmem>>, %arg5: memref<1x256xf32, #tpu.memory_space<vmem>>, %arg6: memref<256x64xbf16, #tpu.memory_space<vmem>>, %arg7: memref<1x64xf32, #tpu.memory_space<vmem>>, %arg8: memref<64x4xbf16, #tpu.memory_space<vmem>>, %arg9: memref<1x4xf32, #tpu.memory_space<vmem>>, %arg10: memref<8x4xf32, #tpu.memory_space<vmem>>) attributes {dimension_semantics = [#tpu.dimension_semantics<parallel>], iteration_bounds = array<i64: 1>, scalar_prefetch = 0 : i64, scratch_operands = 0 : i64, tpu.core_type = #tpu.core_type<tc>, window_params = [{transform_indices = @transform_0, window_bounds = array<i64: 8, 8>}, {pipeline_mode = #tpu.pipeline_mode<synchronous>, transform_indices = @transform_1, window_bounds = array<i64: 8, 128>}, {pipeline_mode = #tpu.pipeline_mode<synchronous>, transform_indices = @transform_2, window_bounds = array<i64: 1, 128>}, {pipeline_mode = #tpu.pipeline_mode<synchronous>, transform_indices = @transform_3, window_bounds = array<i64: 128, 256>}, {pipeline_mode = #tpu.pipeline_mode<synchronous>, transform_indices = @transform_4, window_bounds = array<i64: 1, 256>}, {pipeline_mode = #tpu.pipeline_mode<synchronous>, transform_indices = @transform_5, window_bounds = array<i64: 256, 64>}, {pipeline_mode = #tpu.pipeline_mode<synchronous>, transform_indices = @transform_6, window_bounds = array<i64: 1, 64>}, {pipeline_mode = #tpu.pipeline_mode<synchronous>, transform_indices = @transform_7, window_bounds = array<i64: 64, 4>}, {pipeline_mode = #tpu.pipeline_mode<synchronous>, transform_indices = @transform_8, window_bounds = array<i64: 1, 4>}, {transform_indices = @transform_9, window_bounds = array<i64: 8, 4>}]} {
    %c0 = arith.constant 0 : index
    %c0_0 = arith.constant 0 : index
    %0 = vector.load %arg1[%c0, %c0_0] : memref<8x8xbf16, #tpu.memory_space<vmem>>, vector<8x8xbf16>
    %c0_1 = arith.constant 0 : index
    %c0_2 = arith.constant 0 : index
    %1 = vector.load %arg2[%c0_1, %c0_2] : memref<8x128xbf16, #tpu.memory_space<vmem>>, vector<8x128xbf16>
    %cst = arith.constant dense<0.000000e+00> : vector<8x128xf32>
    %2 = tpu.matmul %0, %1, %cst {dimension_numbers = #tpu.dot_dimension_numbers<[1], [0], [0], [1], [0, 0, 1, 1], [], []>} : vector<8x8xbf16>, vector<8x128xbf16>, vector<8x128xf32> -> vector<8x128xf32>
    %c0_3 = arith.constant 0 : index
    %c0_4 = arith.constant 0 : index
    %3 = vector.load %arg3[%c0_3, %c0_4] : memref<1x128xf32, #tpu.memory_space<vmem>>, vector<1x128xf32>
    %4 = vector.broadcast %3 : vector<1x128xf32> to vector<8x128xf32>
    %5 = arith.addf %2, %4 : vector<8x128xf32>
    %cst_5 = arith.constant 0.000000e+00 : f32
    %6 = vector.broadcast %cst_5 : f32 to vector<8x128xf32>
    %7 = arith.cmpf ogt, %5, %6 : vector<8x128xf32>
    %cst_6 = arith.constant 0.00999999977 : f32
    %8 = vector.broadcast %cst_6 : f32 to vector<8x128xf32>
    %9 = arith.mulf %8, %5 : vector<8x128xf32>
    %10 = arith.select %7, %5, %9 : vector<8x128xi1>, vector<8x128xf32>
    %11 = arith.truncf %10 : vector<8x128xf32> to vector<8x128xbf16>
    %c0_7 = arith.constant 0 : index
    %c0_8 = arith.constant 0 : index
    %12 = vector.load %arg4[%c0_7, %c0_8] : memref<128x256xbf16, #tpu.memory_space<vmem>>, vector<128x256xbf16>
    %cst_9 = arith.constant dense<0.000000e+00> : vector<8x256xf32>
    %13 = tpu.matmul %11, %12, %cst_9 {dimension_numbers = #tpu.dot_dimension_numbers<[1], [0], [0], [1], [0, 0, 1, 1], [], []>} : vector<8x128xbf16>, vector<128x256xbf16>, vector<8x256xf32> -> vector<8x256xf32>
    %c0_10 = arith.constant 0 : index
    %c0_11 = arith.constant 0 : index
    %14 = vector.load %arg5[%c0_10, %c0_11] : memref<1x256xf32, #tpu.memory_space<vmem>>, vector<1x256xf32>
    %15 = vector.broadcast %14 : vector<1x256xf32> to vector<8x256xf32>
    %16 = arith.addf %13, %15 : vector<8x256xf32>
    %cst_12 = arith.constant 0.000000e+00 : f32
    %17 = vector.broadcast %cst_12 : f32 to vector<8x256xf32>
    %18 = arith.cmpf ogt, %16, %17 : vector<8x256xf32>
    %cst_13 = arith.constant 0.00999999977 : f32
    %19 = vector.broadcast %cst_13 : f32 to vector<8x256xf32>
    %20 = arith.mulf %19, %16 : vector<8x256xf32>
    %21 = arith.select %18, %16, %20 : vector<8x256xi1>, vector<8x256xf32>
    %22 = arith.truncf %21 : vector<8x256xf32> to vector<8x256xbf16>
    %c0_14 = arith.constant 0 : index
    %c0_15 = arith.constant 0 : index
    %23 = vector.load %arg6[%c0_14, %c0_15] : memref<256x64xbf16, #tpu.memory_space<vmem>>, vector<256x64xbf16>
    %cst_16 = arith.constant dense<0.000000e+00> : vector<8x64xf32>
    %24 = tpu.matmul %22, %23, %cst_16 {dimension_numbers = #tpu.dot_dimension_numbers<[1], [0], [0], [1], [0, 0, 1, 1], [], []>} : vector<8x256xbf16>, vector<256x64xbf16>, vector<8x64xf32> -> vector<8x64xf32>
    %c0_17 = arith.constant 0 : index
    %c0_18 = arith.constant 0 : index
    %25 = vector.load %arg7[%c0_17, %c0_18] : memref<1x64xf32, #tpu.memory_space<vmem>>, vector<1x64xf32>
    %26 = vector.broadcast %25 : vector<1x64xf32> to vector<8x64xf32>
    %27 = arith.addf %24, %26 : vector<8x64xf32>
    %cst_19 = arith.constant 0.000000e+00 : f32
    %28 = vector.broadcast %cst_19 : f32 to vector<8x64xf32>
    %29 = arith.cmpf ogt, %27, %28 : vector<8x64xf32>
    %cst_20 = arith.constant 0.00999999977 : f32
    %30 = vector.broadcast %cst_20 : f32 to vector<8x64xf32>
    %31 = arith.mulf %30, %27 : vector<8x64xf32>
    %32 = arith.select %29, %27, %31 : vector<8x64xi1>, vector<8x64xf32>
    %33 = arith.truncf %32 : vector<8x64xf32> to vector<8x64xbf16>
    %c0_21 = arith.constant 0 : index
    %c0_22 = arith.constant 0 : index
    %34 = vector.load %arg8[%c0_21, %c0_22] : memref<64x4xbf16, #tpu.memory_space<vmem>>, vector<64x4xbf16>
    %cst_23 = arith.constant dense<0.000000e+00> : vector<8x4xf32>
    %35 = tpu.matmul %33, %34, %cst_23 {dimension_numbers = #tpu.dot_dimension_numbers<[1], [0], [0], [1], [0, 0, 1, 1], [], []>} : vector<8x64xbf16>, vector<64x4xbf16>, vector<8x4xf32> -> vector<8x4xf32>
    %c0_24 = arith.constant 0 : index
    %c0_25 = arith.constant 0 : index
    %36 = vector.load %arg9[%c0_24, %c0_25] : memref<1x4xf32, #tpu.memory_space<vmem>>, vector<1x4xf32>
    %37 = vector.broadcast %36 : vector<1x4xf32> to vector<8x4xf32>
    %38 = arith.addf %35, %37 : vector<8x4xf32>
    %c0_26 = arith.constant 0 : index
    %c0_27 = arith.constant 0 : index
    %39 = vector.load %arg10[%c0_26, %c0_27] : memref<8x4xf32, #tpu.memory_space<vmem>>, vector<8x4xf32>
    tpu.vector_store %arg10[%c0_26, %c0_27], %38 {strides = array<i32>} : memref<8x4xf32, #tpu.memory_space<vmem>>, vector<8x4xf32>,
    return
  }
  func.func @transform_0(%arg0: i32) -> (i32, i32) {
    %c0_i32 = arith.constant 0 : i32
    %c0_i32_0 = arith.constant 0 : i32
    return %arg0, %c0_i32 : i32, i32
  }
  func.func @transform_1(%arg0: i32) -> (i32, i32) {
    %c0_i32 = arith.constant 0 : i32
    %c0_i32_0 = arith.constant 0 : i32
    %c0_i32_1 = arith.constant 0 : i32
    return %c0_i32, %c0_i32_0 : i32, i32
  }
  func.func @transform_2(%arg0: i32) -> (i32, i32) {
    %c0_i32 = arith.constant 0 : i32
    %c0_i32_0 = arith.constant 0 : i32
    %c0_i32_1 = arith.constant 0 : i32
    return %c0_i32, %c0_i32_0 : i32, i32
  }
  func.func @transform_3(%arg0: i32) -> (i32, i32) {
    %c0_i32 = arith.constant 0 : i32
    %c0_i32_0 = arith.constant 0 : i32
    %c0_i32_1 = arith.constant 0 : i32
    return %c0_i32, %c0_i32_0 : i32, i32
  }
  func.func @transform_4(%arg0: i32) -> (i32, i32) {
    %c0_i32 = arith.constant 0 : i32
    %c0_i32_0 = arith.constant 0 : i32
    %c0_i32_1 = arith.constant 0 : i32
    return %c0_i32, %c0_i32_0 : i32, i32
  }
  func.func @transform_5(%arg0: i32) -> (i32, i32) {
    %c0_i32 = arith.constant 0 : i32
    %c0_i32_0 = arith.constant 0 : i32
    %c0_i32_1 = arith.constant 0 : i32
    return %c0_i32, %c0_i32_0 : i32, i32
  }
  func.func @transform_6(%arg0: i32) -> (i32, i32) {
    %c0_i32 = arith.constant 0 : i32
    %c0_i32_0 = arith.constant 0 : i32
    %c0_i32_1 = arith.constant 0 : i32
    return %c0_i32, %c0_i32_0 : i32, i32
  }
  func.func @transform_7(%arg0: i32) -> (i32, i32) {
    %c0_i32 = arith.constant 0 : i32
    %c0_i32_0 = arith.constant 0 : i32
    %c0_i32_1 = arith.constant 0 : i32
    return %c0_i32, %c0_i32_0 : i32, i32
  }
  func.func @transform_8(%arg0: i32) -> (i32, i32) {
    %c0_i32 = arith.constant 0 : i32
    %c0_i32_0 = arith.constant 0 : i32
    %c0_i32_1 = arith.constant 0 : i32
    return %c0_i32, %c0_i32_0 : i32, i32
  }
  func.func @transform_9(%arg0: i32) -> (i32, i32) {
    %c0_i32 = arith.constant 0 : i32
    %c0_i32_0 = arith.constant 0 : i32
    return %arg0, %c0_i32 : i32, i32
  }
}

</mosaic_0001>

<llo_original>
// kernel: dqn_forward.1
$region0: #{dqn_forward.1}
  #allocation0 [shape = 'u32[]', space=smem, size = 0x4, offset = 0x4, fixed_abs, tag = 'smem constant byte address 0x4 - core index']
  #allocation1 [shape = 'u32[144,128]{1,0:T(1,128)}', space=vmem, size = 0x12000, scoped, tag = 'internal scratch']
  %s0 = inlined_call_operand.vmem [shape: bf16[8,8], index: 0, kind: input, shape index: {}]
  %s1 = inlined_call_operand.vmem [shape: bf16[8,128], index: 1, kind: input, shape index: {}]
  %s2 = inlined_call_operand.vmem [shape: f32[1,128], index: 2, kind: input, shape index: {}]
  %s3 = inlined_call_operand.vmem [shape: bf16[128,256], index: 3, kind: input, shape index: {}]
  %s4 = inlined_call_operand.vmem [shape: f32[1,256], index: 4, kind: input, shape index: {}]
  %s5 = inlined_call_operand.vmem [shape: bf16[256,64], index: 5, kind: input, shape index: {}]
  %s6 = inlined_call_operand.vmem [shape: f32[1,64], index: 6, kind: input, shape index: {}]
  %s7 = inlined_call_operand.vmem [shape: bf16[64,4], index: 7, kind: input, shape index: {}]
  %s8 = inlined_call_operand.vmem [shape: f32[1,4], index: 8, kind: input, shape index: {}]
  %s9 = inlined_call_operand.vmem [shape: f32[8,4], index: 9, kind: output, shape index: {}]
  %s10 = sld [smem:[#allocation0]]
  $region46: #{dqn_forward.1} parent=0
    _
  %s12 = ssub.s32 1, %s10
  %s13 = scalar_select 0, %s12, %s10
  // Predicated region
  $region2: #{dqn_forward.1} parent=0 // pred_check
    _
  $region3: #{dqn_forward.1} parent=0 // pred_check_branch
    %15 = sbr.rel (0) target = $region5
  $region4: #{dqn_forward.1} parent=0 // pred_region
    _
  $region5: #{dqn_forward.1} parent=0 // pred_fallthru
    _
  // Predicated region
  $region6: #{dqn_forward.1} parent=0 // pred_check
    _
  $region7: #{dqn_forward.1} parent=0 // pred_check_branch
    %17 = sbr.rel (0) target = $region9
  $region8: #{dqn_forward.1} parent=0 // pred_region
    _
  $region9: #{dqn_forward.1} parent=0 // pred_fallthru
    _
  // Predicated region
  $region10: #{dqn_forward.1} parent=0 // pred_check
    _
  $region11: #{dqn_forward.1} parent=0 // pred_check_branch
    %19 = sbr.rel (0) target = $region13
  $region12: #{dqn_forward.1} parent=0 // pred_region
    _
  $region13: #{dqn_forward.1} parent=0 // pred_fallthru
    _
  // Predicated region
  $region14: #{dqn_forward.1} parent=0 // pred_check
    _
  $region15: #{dqn_forward.1} parent=0 // pred_check_branch
    %21 = sbr.rel (0) target = $region17
  $region16: #{dqn_forward.1} parent=0 // pred_region
    _
  $region17: #{dqn_forward.1} parent=0 // pred_fallthru
    _
  // Predicated region
  $region18: #{dqn_forward.1} parent=0 // pred_check
    _
  $region19: #{dqn_forward.1} parent=0 // pred_check_branch
    %23 = sbr.rel (0) target = $region21
  $region20: #{dqn_forward.1} parent=0 // pred_region
    _
  $region21: #{dqn_forward.1} parent=0 // pred_fallthru
    _
  // Predicated region
  $region22: #{dqn_forward.1} parent=0 // pred_check
    _
  $region23: #{dqn_forward.1} parent=0 // pred_check_branch
    %25 = sbr.rel (0) target = $region25
  $region24: #{dqn_forward.1} parent=0 // pred_region
    _
  $region25: #{dqn_forward.1} parent=0 // pred_fallthru
    _
  // Predicated region
  $region26: #{dqn_forward.1} parent=0 // pred_check
    _
  $region27: #{dqn_forward.1} parent=0 // pred_check_branch
    %27 = sbr.rel (0) target = $region29
  $region28: #{dqn_forward.1} parent=0 // pred_region
    _
  $region29: #{dqn_forward.1} parent=0 // pred_fallthru
    _
  // Predicated region
  $region30: #{dqn_forward.1} parent=0 // pred_check
    _
  $region31: #{dqn_forward.1} parent=0 // pred_check_branch
    %29 = sbr.rel (0) target = $region33
  $region32: #{dqn_forward.1} parent=0 // pred_region
    _
  $region33: #{dqn_forward.1} parent=0 // pred_fallthru
    _
  // Predicated region
  $region34: #{dqn_forward.1} parent=0 // pred_check
    _
  $region35: #{dqn_forward.1} parent=0 // pred_check_branch
    %31 = sbr.rel (0) target = $region37
  $region36: #{dqn_forward.1} parent=0 // pred_region
    _
  $region37: #{dqn_forward.1} parent=0 // pred_fallthru
    _
  %v33 = vld [vmem:[%s0] sm:$0xf]
  %v34 = vld [vmem:[%s1] sm:$0xf]
  %v35 = vld [vmem:[%s2] sm:$0x1]
  %v37 = vlaneseq
  %v38 = vshrl.u32 %v37, 7
  %v39 = vsub.s32 0, %v38
  %v40 = vrot.slane %v35, %v39
  %vm42 = vcmask 64512
  %v44 = vsel %vm42, %v33, 0
  %vm46 = vcmask 1043456
  %v48 = vsel %vm46, %v34, 0
  %50 = vmatprep.subr.bf16.mxu0 0
  %51 = vmatpush1.bf16.msra.mxu0 0
  %52 = vmatprep.subr.bf16.mxu0 0
  %53 = vmatpush1.bf16.msra.mxu0 0
  %54 = vmatprep.subr.bf16.mxu0 0
  %55 = vmatpush1.bf16.msra.mxu0 0
  %56 = vmatprep.subr.bf16.mxu0 0
  %57 = vmatpush1.bf16.msra.mxu0 0
  %58 = vmatprep.subr.bf16.mxu0 0
  %59 = vmatpush1.bf16.msra.mxu0 0
  %60 = vmatprep.subr.bf16.mxu0 0
  %61 = vmatpush1.bf16.msra.mxu0 0
  %62 = vmatprep.subr.bf16.mxu0 0
  %63 = vmatpush1.bf16.msra.mxu0 0
  %64 = vmatprep.subr.bf16.mxu0 0
  %65 = vmatpush1.bf16.msra.mxu0 %v48
  %66 = vmatprep.subr.bf16.mxu0 0
  %67 = vmatpush2.bf16.msra.mxu0 0
  %68 = vmatprep.subr.bf16.mxu0 0
  %69 = vmatpush2.bf16.msra.mxu0 0
  %70 = vmatprep.subr.bf16.mxu0 0
  %71 = vmatpush2.bf16.msra.mxu0 0
  %72 = vmatprep.subr.bf16.mxu0 0
  %73 = vmatpush2.bf16.msra.mxu0 0
  %74 = vmatprep.subr.bf16.mxu0 0
  %75 = vmatpush2.bf16.msra.mxu0 0
  %76 = vmatprep.subr.bf16.mxu0 0
  %77 = vmatpush2.bf16.msra.mxu0 0
  %78 = vmatprep.subr.bf16.mxu0 0
  %79 = vmatpush2.bf16.msra.mxu0 0
  %80 = vmatprep.subr.bf16.mxu0 0
  %81 = vmatpush2.bf16.msra.mxu0 0
  %82 = vmatprep.mubr.bf16.mxu0 0
  %83 = vmatmul.mubr.bf16.gmra.mxu0 %v44
  %v84 = vpop.f32.mrf.mxu0
  %v85 = vadd.f32 %v40, %v84
  %v86 = vpop.f32.mrf.mxu0
  %v87 = vpop.f32.mrf.mxu0
  %v88 = vpop.f32.mrf.mxu0
  %89 = vdwg.mxu0
  %vm90 = vcmp.gt.f32.partialorder %v85, 0.0
  %v91 = vmul.f32 %v85, 0.01
  %v92 = vsel %vm90, %v85, %v91
  %v93 = vpack.c.bf16 %v92, %v92
  %v94 = vld [vmem:[%s3] sm:$0xff]
  %v95 = vld [vmem:[%s3 + $0x8] sm:$0xff]
  %v96 = vld [vmem:[%s3 + $0x10] sm:$0xff]
  %v97 = vld [vmem:[%s3 + $0x18] sm:$0xff]
  %v98 = vld [vmem:[%s3 + $0x20] sm:$0xff]
  %v99 = vld [vmem:[%s3 + $0x28] sm:$0xff]
  %v100 = vld [vmem:[%s3 + $0x30] sm:$0xff]
  %v101 = vld [vmem:[%s3 + $0x38] sm:$0xff]
  %v102 = vld [vmem:[%s3 + $0x40] sm:$0xff]
  %v103 = vld [vmem:[%s3 + $0x48] sm:$0xff]
  %v104 = vld [vmem:[%s3 + $0x50] sm:$0xff]
  %v105 = vld [vmem:[%s3 + $0x58] sm:$0xff]
  %v106 = vld [vmem:[%s3 + $0x60] sm:$0xff]
  %v107 = vld [vmem:[%s3 + $0x68] sm:$0xff]
  %v108 = vld [vmem:[%s3 + $0x70] sm:$0xff]
  %v109 = vld [vmem:[%s3 + $0x78] sm:$0xff]
  %v110 = vld [vmem:[%s4] sm:$0x3]
  %v112 = vlaneseq
  %v113 = vshrl.u32 %v112, 7
  %v114 = vsub.s32 0, %v113
  %v115 = vrot.slane %v110, %v114
  %v116 = vlaneseq
  %v117 = vshrl.u32 %v116, 7
  %v118 = vsub.s32 1, %v117
  %v119 = vrot.slane %v110, %v118
  %v138 = vunpack.c.l.b16 %v94
  %v139 = vunpack.c.h.b16 %v94
  %v140 = vunpack.c.l.b16 %v95
  %v141 = vunpack.c.h.b16 %v95
  %v142 = vunpack.c.l.b16 %v96
  %v143 = vunpack.c.h.b16 %v96
  %v144 = vunpack.c.l.b16 %v97
  %v145 = vunpack.c.h.b16 %v97
  %v146 = vunpack.c.l.b16 %v98
  %v147 = vunpack.c.h.b16 %v98
  %v148 = vunpack.c.l.b16 %v99
  %v149 = vunpack.c.h.b16 %v99
  %v150 = vunpack.c.l.b16 %v100
  %v151 = vunpack.c.h.b16 %v100
  %v152 = vunpack.c.l.b16 %v101
  %v153 = vunpack.c.h.b16 %v101
  %v154 = vunpack.c.l.b16 %v102
  %v155 = vunpack.c.h.b16 %v102
  %v156 = vunpack.c.l.b16 %v103
  %v157 = vunpack.c.h.b16 %v103
  %v158 = vunpack.c.l.b16 %v104
  %v159 = vunpack.c.h.b16 %v104
  %v160 = vunpack.c.l.b16 %v105
  %v161 = vunpack.c.h.b16 %v105
  %v162 = vunpack.c.l.b16 %v106
  %v163 = vunpack.c.h.b16 %v106
  %v164 = vunpack.c.l.b16 %v107
  %v165 = vunpack.c.h.b16 %v107
  %v166 = vunpack.c.l.b16 %v108
  %v167 = vunpack.c.h.b16 %v108
  %v168 = vunpack.c.l.b16 %v109
  %v169 = vunpack.c.h.b16 %v109
  %v170 = vpack.c.b16 %v140, %v138
  %v171 = vpack.c.b16 %v141, %v139
  %v172 = vpack.c.b16 %v144, %v142
  %v173 = vpack.c.b16 %v145, %v143
  %v174 = vpack.c.b16 %v148, %v146
  %v175 = vpack.c.b16 %v149, %v147
  %v176 = vpack.c.b16 %v152, %v150
  %v177 = vpack.c.b16 %v153, %v151
  %v178 = vpack.c.b16 %v156, %v154
  %v179 = vpack.c.b16 %v157, %v155
  %v180 = vpack.c.b16 %v160, %v158
  %v181 = vpack.c.b16 %v161, %v159
  %v182 = vpack.c.b16 %v164, %v162
  %v183 = vpack.c.b16 %v165, %v163
  %v184 = vpack.c.b16 %v168, %v166
  %v185 = vpack.c.b16 %v169, %v167
  %202 = vmatprep.subr.bf16.mxu0 %v185
  %203 = vmatpush1.bf16.msra.mxu0 %v184
  %204 = vmatprep.subr.bf16.mxu0 %v183
  %205 = vmatpush1.bf16.msra.mxu0 %v182
  %206 = vmatprep.subr.bf16.mxu0 %v181
  %207 = vmatpush1.bf16.msra.mxu0 %v180
  %208 = vmatprep.subr.bf16.mxu0 %v179
  %209 = vmatpush1.bf16.msra.mxu0 %v178
  %210 = vmatprep.subr.bf16.mxu0 %v177
  %211 = vmatpush1.bf16.msra.mxu0 %v176
  %212 = vmatprep.subr.bf16.mxu0 %v175
  %213 = vmatpush1.bf16.msra.mxu0 %v174
  %214 = vmatprep.subr.bf16.mxu0 %v173
  %215 = vmatpush1.bf16.msra.mxu0 %v172
  %216 = vmatprep.subr.bf16.mxu0 %v171
  %217 = vmatpush1.bf16.msra.mxu0 %v170
  %218 = vmatprep.subr.bf16.mxu0 0
  %219 = vmatpush2.bf16.msra.mxu0 0
  %220 = vmatprep.subr.bf16.mxu0 0
  %221 = vmatpush2.bf16.msra.mxu0 0
  %222 = vmatprep.subr.bf16.mxu0 0
  %223 = vmatpush2.bf16.msra.mxu0 0
  %224 = vmatprep.subr.bf16.mxu0 0
  %225 = vmatpush2.bf16.msra.mxu0 0
  %226 = vmatprep.subr.bf16.mxu0 0
  %227 = vmatpush2.bf16.msra.mxu0 0
  %228 = vmatprep.subr.bf16.mxu0 0
  %229 = vmatpush2.bf16.msra.mxu0 0
  %230 = vmatprep.subr.bf16.mxu0 0
  %231 = vmatpush2.bf16.msra.mxu0 0
  %232 = vmatprep.subr.bf16.mxu0 0
  %233 = vmatpush2.bf16.msra.mxu0 0
  %234 = vmatprep.mubr.bf16.mxu0 0
  %235 = vmatmul.mubr.bf16.gmra.mxu0 %v93
  %v236 = vpop.f32.mrf.mxu0
  %v237 = vadd.f32 %v115, %v236
  %v238 = vpop.f32.mrf.mxu0
  %v239 = vadd.f32 %v119, %v238
  %v240 = vpop.f32.mrf.mxu0
  %v241 = vpop.f32.mrf.mxu0
  %242 = vdwg.mxu0
  %vm243 = vcmp.gt.f32.partialorder %v237, 0.0
  %vm244 = vcmp.gt.f32.partialorder %v239, 0.0
  %v245 = vmul.f32 %v237, 0.01
  %v246 = vmul.f32 %v239, 0.01
  %v247 = vsel %vm243, %v237, %v245
  %v248 = vsel %vm244, %v239, %v246
  %v249 = vpack.c.bf16 %v247, %v247
  %v250 = vpack.c.bf16 %v248, %v248
  %v251 = vld [vmem:[%s5] sm:$0xf]
  %v252 = vld [vmem:[%s5 + $0x4] sm:$0xf]
  %v253 = vld [vmem:[%s5 + $0x8] sm:$0xf]
  %v254 = vld [vmem:[%s5 + $0xc] sm:$0xf]
  %v255 = vld [vmem:[%s5 + $0x10] sm:$0xf]
  %v256 = vld [vmem:[%s5 + $0x14] sm:$0xf]
  %v257 = vld [vmem:[%s5 + $0x18] sm:$0xf]
  %v258 = vld [vmem:[%s5 + $0x1c] sm:$0xf]
  %v259 = vld [vmem:[%s5 + $0x20] sm:$0xf]
  %v260 = vld [vmem:[%s5 + $0x24] sm:$0xf]
  %v261 = vld [vmem:[%s5 + $0x28] sm:$0xf]
  %v262 = vld [vmem:[%s5 + $0x2c] sm:$0xf]
  %v263 = vld [vmem:[%s5 + $0x30] sm:$0xf]
  %v264 = vld [vmem:[%s5 + $0x34] sm:$0xf]
  %v265 = vld [vmem:[%s5 + $0x38] sm:$0xf]
  %v266 = vld [vmem:[%s5 + $0x3c] sm:$0xf]
  %v267 = vld [vmem:[%s5 + $0x40] sm:$0xf]
  %v268 = vld [vmem:[%s5 + $0x44] sm:$0xf]
  %v269 = vld [vmem:[%s5 + $0x48] sm:$0xf]
  %v270 = vld [vmem:[%s5 + $0x4c] sm:$0xf]
  %v271 = vld [vmem:[%s5 + $0x50] sm:$0xf]
  %v272 = vld [vmem:[%s5 + $0x54] sm:$0xf]
  %v273 = vld [vmem:[%s5 + $0x58] sm:$0xf]
  %v274 = vld [vmem:[%s5 + $0x5c] sm:$0xf]
  %v275 = vld [vmem:[%s5 + $0x60] sm:$0xf]
  %v276 = vld [vmem:[%s5 + $0x64] sm:$0xf]
  %v277 = vld [vmem:[%s5 + $0x68] sm:$0xf]
  %v278 = vld [vmem:[%s5 + $0x6c] sm:$0xf]
  %v279 = vld [vmem:[%s5 + $0x70] sm:$0xf]
  %v280 = vld [vmem:[%s5 + $0x74] sm:$0xf]
  %v281 = vld [vmem:[%s5 + $0x78] sm:$0xf]
  %v282 = vld [vmem:[%s5 + $0x7c] sm:$0xf]
  %v283 = vld [vmem:[%s6] sm:$0x1]
  %v285 = vlaneseq
  %v286 = vshrl.u32 %v285, 7
  %v287 = vsub.s32 0, %v286
  %v288 = vrot.slane %v283, %v287
  %v322 = vunpack.c.l.b16 %v251
  %v323 = vunpack.c.l.b16 %v252
  %v324 = vunpack.c.l.b16 %v253
  %v325 = vunpack.c.l.b16 %v254
  %v326 = vunpack.c.l.b16 %v255
  %v327 = vunpack.c.l.b16 %v256
  %v328 = vunpack.c.l.b16 %v257
  %v329 = vunpack.c.l.b16 %v258
  %v330 = vunpack.c.l.b16 %v259
  %v331 = vunpack.c.l.b16 %v260
  %v332 = vunpack.c.l.b16 %v261
  %v333 = vunpack.c.l.b16 %v262
  %v334 = vunpack.c.l.b16 %v263
  %v335 = vunpack.c.l.b16 %v264
  %v336 = vunpack.c.l.b16 %v265
  %v337 = vunpack.c.l.b16 %v266
  %v338 = vunpack.c.l.b16 %v267
  %v339 = vunpack.c.l.b16 %v268
  %v340 = vunpack.c.l.b16 %v269
  %v341 = vunpack.c.l.b16 %v270
  %v342 = vunpack.c.l.b16 %v271
  %v343 = vunpack.c.l.b16 %v272
  %v344 = vunpack.c.l.b16 %v273
  %v345 = vunpack.c.l.b16 %v274
  %v346 = vunpack.c.l.b16 %v275
  %v347 = vunpack.c.l.b16 %v276
  %v348 = vunpack.c.l.b16 %v277
  %v349 = vunpack.c.l.b16 %v278
  %v350 = vunpack.c.l.b16 %v279
  %v351 = vunpack.c.l.b16 %v280
  %v352 = vunpack.c.l.b16 %v281
  %v353 = vunpack.c.l.b16 %v282
  %v354 = vpack.c.b16 %v323, %v322
  %v355 = vpack.c.b16 %v325, %v324
  %v356 = vpack.c.b16 %v327, %v326
  %v357 = vpack.c.b16 %v329, %v328
  %v358 = vpack.c.b16 %v331, %v330
  %v359 = vpack.c.b16 %v333, %v332
  %v360 = vpack.c.b16 %v335, %v334
  %v361 = vpack.c.b16 %v337, %v336
  %v362 = vpack.c.b16 %v339, %v338
  %v363 = vpack.c.b16 %v341, %v340
  %v364 = vpack.c.b16 %v343, %v342
  %v365 = vpack.c.b16 %v345, %v344
  %v366 = vpack.c.b16 %v347, %v346
  %v367 = vpack.c.b16 %v349, %v348
  %v368 = vpack.c.b16 %v351, %v350
  %v369 = vpack.c.b16 %v353, %v352
  %386 = vmatprep.subr.bf16.mxu0 0
  %387 = vmatpush1.bf16.msra.mxu0 %v361
  %388 = vmatprep.subr.bf16.mxu0 0
  %389 = vmatpush1.bf16.msra.mxu0 %v360
  %390 = vmatprep.subr.bf16.mxu0 0
  %391 = vmatpush1.bf16.msra.mxu0 %v359
  %392 = vmatprep.subr.bf16.mxu0 0
  %393 = vmatpush1.bf16.msra.mxu0 %v358
  %394 = vmatprep.subr.bf16.mxu0 0
  %395 = vmatpush1.bf16.msra.mxu0 %v357
  %396 = vmatprep.subr.bf16.mxu0 0
  %397 = vmatpush1.bf16.msra.mxu0 %v356
  %398 = vmatprep.subr.bf16.mxu0 0
  %399 = vmatpush1.bf16.msra.mxu0 %v355
  %400 = vmatprep.subr.bf16.mxu0 0
  %401 = vmatpush1.bf16.msra.mxu0 %v354
  %402 = vmatprep.subr.bf16.mxu0 0
  %403 = vmatpush2.bf16.msra.mxu0 %v369
  %404 = vmatprep.subr.bf16.mxu0 0
  %405 = vmatpush2.bf16.msra.mxu0 %v368
  %406 = vmatprep.subr.bf16.mxu0 0
  %407 = vmatpush2.bf16.msra.mxu0 %v367
  %408 = vmatprep.subr.bf16.mxu0 0
  %409 = vmatpush2.bf16.msra.mxu0 %v366
  %410 = vmatprep.subr.bf16.mxu0 0
  %411 = vmatpush2.bf16.msra.mxu0 %v365
  %412 = vmatprep.subr.bf16.mxu0 0
  %413 = vmatpush2.bf16.msra.mxu0 %v364
  %414 = vmatprep.subr.bf16.mxu0 0
  %415 = vmatpush2.bf16.msra.mxu0 %v363
  %416 = vmatprep.subr.bf16.mxu0 0
  %417 = vmatpush2.bf16.msra.mxu0 %v362
  %418 = vmatprep.mubr.bf16.mxu0 %v250
  %419 = vmatmul.mubr.bf16.gmra.mxu0 %v249
  %v420 = vpop.f32.mrf.mxu0
  %v421 = vadd.f32 %v288, %v420
  %v422 = vpop.f32.mrf.mxu0
  %v423 = vpop.f32.mrf.mxu0
  %v424 = vpop.f32.mrf.mxu0
  %425 = vdwg.mxu0
  %vm426 = vcmp.gt.f32.partialorder %v421, 0.0
  %v427 = vmul.f32 %v421, 0.01
  %v428 = vsel %vm426, %v421, %v427
  %v429 = vpack.c.bf16 %v428, %v428
  %v430 = vld [vmem:[%s7] sm:$0xf]
  %v431 = vld [vmem:[%s7 + $0x4] sm:$0xf]
  %v432 = vld [vmem:[%s7 + $0x8] sm:$0xf]
  %v433 = vld [vmem:[%s7 + $0xc] sm:$0xf]
  %v434 = vld [vmem:[%s7 + $0x10] sm:$0xf]
  %v435 = vld [vmem:[%s7 + $0x14] sm:$0xf]
  %v436 = vld [vmem:[%s7 + $0x18] sm:$0xf]
  %v437 = vld [vmem:[%s7 + $0x1c] sm:$0xf]
  %v438 = vld [vmem:[%s8] sm:$0x1]
  %v440 = vlaneseq
  %v441 = vshrl.u32 %v440, 7
  %v442 = vsub.s32 0, %v441
  %v443 = vrot.slane %v438, %v442
  %v453 = vunpack.c.l.b16 %v430
  %v454 = vunpack.c.l.b16 %v431
  %v455 = vunpack.c.l.b16 %v432
  %v456 = vunpack.c.l.b16 %v433
  %v457 = vunpack.c.l.b16 %v434
  %v458 = vunpack.c.l.b16 %v435
  %v459 = vunpack.c.l.b16 %v436
  %v460 = vunpack.c.l.b16 %v437
  %v461 = vpack.c.b16 %v454, %v453
  %v462 = vpack.c.b16 %v456, %v455
  %v463 = vpack.c.b16 %v458, %v457
  %v464 = vpack.c.b16 %v460, %v459
  %vm469 = vcmask 523264
  %v471 = vsel %vm469, %v429, 0
  %473 = vmatprep.subr.bf16.mxu0 0
  %474 = vmatpush1.bf16.msra.mxu0 0
  %475 = vmatprep.subr.bf16.mxu0 0
  %476 = vmatpush1.bf16.msra.mxu0 0
  %477 = vmatprep.subr.bf16.mxu0 0
  %478 = vmatpush1.bf16.msra.mxu0 0
  %479 = vmatprep.subr.bf16.mxu0 0
  %480 = vmatpush1.bf16.msra.mxu0 0
  %481 = vmatprep.subr.bf16.mxu0 0
  %482 = vmatpush1.bf16.msra.mxu0 %v464
  %483 = vmatprep.subr.bf16.mxu0 0
  %484 = vmatpush1.bf16.msra.mxu0 %v463
  %485 = vmatprep.subr.bf16.mxu0 0
  %486 = vmatpush1.bf16.msra.mxu0 %v462
  %487 = vmatprep.subr.bf16.mxu0 0
  %488 = vmatpush1.bf16.msra.mxu0 %v461
  %489 = vmatprep.subr.bf16.mxu0 0
  %490 = vmatpush2.bf16.msra.mxu0 0
  %491 = vmatprep.subr.bf16.mxu0 0
  %492 = vmatpush2.bf16.msra.mxu0 0
  %493 = vmatprep.subr.bf16.mxu0 0
  %494 = vmatpush2.bf16.msra.mxu0 0
  %495 = vmatprep.subr.bf16.mxu0 0
  %496 = vmatpush2.bf16.msra.mxu0 0
  %497 = vmatprep.subr.bf16.mxu0 0
  %498 = vmatpush2.bf16.msra.mxu0 0
  %499 = vmatprep.subr.bf16.mxu0 0
  %500 = vmatpush2.bf16.msra.mxu0 0
  %501 = vmatprep.subr.bf16.mxu0 0
  %502 = vmatpush2.bf16.msra.mxu0 0
  %503 = vmatprep.subr.bf16.mxu0 0
  %504 = vmatpush2.bf16.msra.mxu0 0
  %505 = vmatprep.mubr.bf16.mxu0 0
  %506 = vmatmul.mubr.bf16.gmra.mxu0 %v471
  %v507 = vpop.f32.mrf.mxu0
  %v508 = vadd.f32 %v443, %v507
  %v509 = vpop.f32.mrf.mxu0
  %v510 = vpop.f32.mrf.mxu0
  %v511 = vpop.f32.mrf.mxu0
  %512 = vdwg.mxu0
  %vm513 = vcmask 31744
  %514 = vst.msk [vmem:[%s9] sm:$0xff] %vm513, %v508
  // Predicated region
  $region38: #{dqn_forward.1} parent=0 // pred_check
    _
  $region39: #{dqn_forward.1} parent=0 // pred_check_branch
    %516 = sbr.rel (0) target = $region41
  $region40: #{dqn_forward.1} parent=0 // pred_region
    _
  $region41: #{dqn_forward.1} parent=0 // pred_fallthru
    _
  // Predicated region
  $region42: #{dqn_forward.1} parent=0 // pred_check
    _
  $region43: #{dqn_forward.1} parent=0 // pred_check_branch
    %518 = sbr.rel (0) target = $region45
  $region44: #{dqn_forward.1} parent=0 // pred_region
    _
  $region45: #{dqn_forward.1} parent=0 // pred_fallthru
    _

</llo_original>
